<compile_context>
chip_gen: v7x
topology: tpu7x:2x2x1
jax: 0.10.0
libtpu: 0.0.40
codegen_flags: <defaults>
</compile_context>

<pallas_src>
import functools

import numpy as np
import jax
import jax.numpy as jnp
from jax.experimental import pallas as pl
from jax.experimental.pallas import tpu as pltpu

_LANE = 128


def _round_up(x, m):
    return (x + m - 1) // m * m


# ---------------------------------------------------------------------------
# Capability probe: single-buffering grid-constant operands via pl.Buffered(1)
# ---------------------------------------------------------------------------
def _probe_copy_kernel(x_ref, o_ref):
    o_ref[...] = x_ref[...]


@functools.lru_cache(maxsize=None)
def _buffered_one_supported():
    """True iff pl.BlockSpec(..., pipeline_mode=pl.Buffered(1)) works here."""
    if not hasattr(pl, "Buffered"):
        return False
    try:
        out = pl.pallas_call(
            _probe_copy_kernel,
            out_shape=jax.ShapeDtypeStruct((8, _LANE), jnp.float32),
            grid=(2,),
            in_specs=[pl.BlockSpec((8, _LANE), lambda i: (0, 0),
                                   pipeline_mode=pl.Buffered(1))],
            out_specs=pl.BlockSpec((8, _LANE), lambda i: (0, 0)),
        )(jnp.ones((8, _LANE), jnp.float32))
        jax.block_until_ready(out)
        return True
    except Exception:
        return False


# ---------------------------------------------------------------------------
# Kernels
# ---------------------------------------------------------------------------
def _psd_from_segments(segs, dft_ref, psd_ref, sb, nseg, ftile):
    # One big MXU matmul: (sb*nseg, nperseg) @ (nperseg, 2*ftile), f32 acc.
    r = jnp.dot(segs, dft_ref[...], preferred_element_type=jnp.float32)
    p = r * r
    # lane-aligned re/im halves (ftile is a multiple of 128) -> free selects.
    per_seg = p[:, :ftile] + p[:, ftile:]                  # (sb*nseg, ftile)
    # Segment-major rows: the per-signal segment mean (1/nseg already folded
    # into the DFT operator) is nseg lane-dense VPU adds, no second matmul.
    acc = per_seg[0:sb, :]
    for s in range(1, nseg):
        acc = acc + per_seg[s * sb:(s + 1) * sb, :]
    psd_ref[...] = acc                                     # (sb, ftile) f32


def _make_framing_kernel(sb, nseg, nstride, nperseg, ftile):
    """In-kernel framing: reads a contiguous (sb, T) signal block and builds the
    (sb*nseg, nperseg) segment matrix in a VMEM scratch (halves HBM traffic at
    50% overlap and removes the host gather/cast pre-pass)."""

    def kernel(x_ref, dft_ref, psd_ref, segs_ref):
        # Frame once per signal block; reuse across the frequency-tile axis.
        @pl.when(pl.program_id(1) == 0)
        def _():
            for s in range(nseg):
                segs_ref[s * sb:(s + 1) * sb, :] = (
                    x_ref[:, s * nstride:s * nstride + nperseg])
        _psd_from_segments(segs_ref[...], dft_ref, psd_ref, sb, nseg, ftile)

    return kernel


def _make_preframed_kernel(sb, nseg, ftile):
    """Fallback for lane-unaligned Welch strides: segments framed on the host
    (segment-major row order within each signal block)."""

    def kernel(segs_ref, dft_ref, psd_ref):
        _psd_from_segments(segs_ref[...], dft_ref, psd_ref, sb, nseg, ftile)

    return kernel


# ---------------------------------------------------------------------------
# Welch PSD via Pallas
# ---------------------------------------------------------------------------
def _welch_psd(stacked, *, sample_rate, fftlength, overlap, matmul_dtype,
               signals_per_block, freq_tile):
    """Welch PSD (mean average, periodic Hann window, detrend='constant',
    density scaling, one-sided) of every row of `stacked` ((nsig, T) f32).
    Returns (nsig, nfreq) float32."""
    nsig, T = stacked.shape
    nperseg = int(fftlength * sample_rate)
    if overlap is None:
        overlap = fftlength / 2
    nstride = nperseg - int(overlap * sample_rate)
    if nstride <= 0 or T < nperseg:
        raise ValueError("invalid Welch parameters")
    nseg = (T - nperseg) // nstride + 1
    nfreq = nperseg // 2 + 1
    nf_pad = _round_up(nfreq, _LANE)

    itemsize = np.dtype(matmul_dtype).itemsize
    base = {4: 8, 2: 16, 1: 32}[itemsize]          # sublane tile of matmul_dtype

    # --- signal rows per grid step (M of the big matmul) ----------------------
    if signals_per_block is not None:
        sb = max(base, _round_up(int(signals_per_block), base))
    else:
        # Aim for M = sb*nseg >= 512 (the MXU is weight-load bound below that),
        # but never pad past the next block boundary of real signals.
        sb = _round_up(max(1, -(-512 // nseg)), base)
        sb = min(sb, _round_up(nsig, base))

    # --- frequency tile: largest multiple of 128 <= freq_tile dividing nf_pad -
    target = max(_LANE, min(_round_up(int(freq_tile), _LANE), nf_pad))
    ftile = _LANE
    for cand in range(_LANE, target + 1, _LANE):
        if nf_pad % cand == 0:
            ftile = cand
    num_ftiles = nf_pad // ftile

    in_kernel_framing = (nstride % _LANE == 0) and (nperseg % _LANE == 0)

    # --- keep the per-step working set comfortably inside VMEM ----------------
    def vmem_estimate(sb_):
        rows_ = sb_ * nseg
        e = 2 * nperseg * 2 * ftile * itemsize             # dft block (<=2 bufs)
        e += 2 * sb_ * ftile * 4                           # psd output block
        e += 3 * rows_ * 2 * ftile * 4                     # f32 intermediates
        if in_kernel_framing:
            e += 2 * sb_ * T * itemsize                    # signal block
            e += rows_ * nperseg * itemsize                # segs scratch
        else:
            e += 2 * rows_ * nperseg * itemsize            # pre-framed block
        return e

    while sb > base and vmem_estimate(sb) > 48 * (1 << 20):
        sb -= base
    vmem_limit = int(min(64 * (1 << 20),
                         max(1.5 * vmem_estimate(sb), 32 * (1 << 20))))

    nsig_pad = _round_up(nsig, sb)
    num_blocks = nsig_pad // sb
    rows = sb * nseg

    # --- fold detrend + window + scaling + 1/nseg into one DFT operator -------
    n = np.arange(nperseg, dtype=np.float64)
    window = 0.5 - 0.5 * np.cos(2.0 * np.pi * n / nperseg)   # periodic Hann
    k = np.arange(nfreq, dtype=np.float64)
    ang = 2.0 * np.pi * np.outer(n, k) / nperseg
    basis = np.concatenate([np.cos(ang), -np.sin(ang)], axis=1)
    detrend = np.eye(nperseg) - np.full((nperseg, nperseg), 1.0 / nperseg)
    folded = detrend @ (window[:, None] * basis)
    scale = 1.0 / (sample_rate * np.sum(window ** 2))
    double = np.ones(nfreq, dtype=np.float64)
    double[1:] = 2.0
    if nperseg % 2 == 0:
        double[-1] = 1.0
    col = np.sqrt(scale * double / nseg)
    re = folded[:, :nfreq] * col
    im = folded[:, nfreq:] * col
    # per-frequency-tile [re | im] column layout (each half ftile lanes wide)
    dft_np = np.zeros((nperseg, num_ftiles * 2 * ftile), dtype=np.float64)
    for t in range(num_ftiles):
        f0 = t * ftile
        w = max(0, min(nfreq - f0, ftile))
        if w > 0:
            dft_np[:, t * 2 * ftile:t * 2 * ftile + w] = re[:, f0:f0 + w]
            dft_np[:, t * 2 * ftile + ftile:t * 2 * ftile + ftile + w] = im[:, f0:f0 + w]
    dft = jnp.asarray(dft_np, dtype=matmul_dtype)

    # --- operands, specs, pipelining -------------------------------------------
    x = jnp.pad(stacked, ((0, nsig_pad - nsig), (0, 0))).astype(matmul_dtype)

    dft_kwargs = {}
    if num_ftiles == 1 and _buffered_one_supported():
        # grid-constant operand: single-buffer it (halves its VMEM footprint)
        dft_kwargs["pipeline_mode"] = pl.Buffered(1)
    dft_spec = pl.BlockSpec((nperseg, 2 * ftile), lambda g, t: (0, t), **dft_kwargs)
    psd_spec = pl.BlockSpec((sb, ftile), lambda g, t: (g, t))

    flops = int(2 * nsig_pad * nseg * nperseg * 2 * nf_pad)
    dft_bytes = int(num_blocks * nperseg * 2 * nf_pad * itemsize)
    out_bytes = int(nsig_pad * nf_pad * 4)

    if in_kernel_framing:
        kernel = _make_framing_kernel(sb, nseg, nstride, nperseg, ftile)
        in_specs = [pl.BlockSpec((sb, T), lambda g, t: (g, 0)), dft_spec]
        operands = (x, dft)
        scratch = (pltpu.VMEM((rows, nperseg), matmul_dtype),)
        # the framed-segment scratch carries state across the frequency-tile
        # axis, so only the signal-block axis is megacore-parallel
        semantics = ("parallel", "arbitrary")
        in_bytes = int(nsig_pad * T * itemsize)
    else:
        frame_idx = (np.arange(nseg) * nstride)[:, None] + np.arange(nperseg)[None, :]
        segs = x[:, frame_idx]                             # (nsig_pad, nseg, nperseg)
        segs = segs.reshape(num_blocks, sb, nseg, nperseg)
        segs = segs.transpose(0, 2, 1, 3).reshape(num_blocks * rows, nperseg)
        kernel = _make_preframed_kernel(sb, nseg, ftile)
        in_specs = [pl.BlockSpec((rows, nperseg), lambda g, t: (g, 0)), dft_spec]
        operands = (segs, dft)
        scratch = ()
        semantics = ("parallel", "parallel")
        in_bytes = int(num_blocks * rows * nperseg * itemsize)

    psd = pl.pallas_call(
        kernel,
        out_shape=jax.ShapeDtypeStruct((nsig_pad, nf_pad), jnp.float32),
        grid_spec=pltpu.PrefetchScalarGridSpec(
            num_scalar_prefetch=0,
            grid=(num_blocks, num_ftiles),
            in_specs=in_specs,
            out_specs=psd_spec,
            scratch_shapes=scratch),
        compiler_params=pltpu.CompilerParams(
            dimension_semantics=semantics,
            vmem_limit_bytes=vmem_limit),
        cost_estimate=pl.CostEstimate(
            flops=flops, transcendentals=0,
            bytes_accessed=in_bytes + dft_bytes + out_bytes),
    )(*operands)
    return psd[:nsig, :nfreq]


# ---------------------------------------------------------------------------
# CompositePSDLoss forward
# ---------------------------------------------------------------------------
def composite_psd_loss(pred, target, *, alpha, sample_rate=None, fftlength=None,
                       overlap=None, asd=False, freq_low=None, freq_high=None,
                       matmul_dtype=jnp.bfloat16, signals_per_block=None,
                       freq_tile=512):
    if not 0 <= alpha <= 1:
        raise ValueError("Alpha value '{}' out of range".format(alpha))
    assert pred.shape == target.shape and pred.ndim == 2
    B, _ = pred.shape
    pred = pred.astype(jnp.float32)
    target = target.astype(jnp.float32)

    mse_loss = None
    if alpha < 1:
        # MSE is purely HBM-bandwidth bound; XLA already sits at the roofline
        # for it, so it stays outside the Pallas kernel (keeps the Welch grid
        # fully 'parallel' on megacore parts, no shared SMEM scalar).
        mse_loss = jnp.mean(jnp.square(target - pred))
    if alpha == 0:
        return mse_loss

    if sample_rate is None or fftlength is None:
        raise ValueError("Must specify both 'sample_rate' and 'fftlength' if alpha > 0")
    if (freq_low is None) != (freq_high is None):
        raise ValueError("freq_low and freq_high must both be given or both be None")

    # Residual and target share one Welch pass: stack into a single operand.
    stacked = jnp.concatenate([target - pred, target], axis=0)       # (2B, T)
    psd = _welch_psd(stacked, sample_rate=sample_rate, fftlength=fftlength,
                     overlap=overlap, matmul_dtype=matmul_dtype,
                     signals_per_block=signals_per_block, freq_tile=freq_tile)
    psd_res, psd_tgt = psd[:B], psd[B:]

    # ---------- frequency-band mask + ratio mean (tiny static glue) ----------
    if freq_low is not None:
        nfreq = psd.shape[1]
        dfreq = 1.0 / fftlength
        freqs = np.arange(nfreq, dtype=np.float64) * dfreq
        mask = np.zeros(nfreq, dtype=bool)
        lows = np.atleast_1d(np.asarray(freq_low, dtype=np.float64))
        highs = np.atleast_1d(np.asarray(freq_high, dtype=np.float64))
        for lo, hi in zip(lows, highs):
            mask |= (lo <= freqs) & (freqs < hi)
        idx = np.nonzero(mask)[0]
        psd_res = psd_res[:, idx]
        psd_tgt = psd_tgt[:, idx]
    # NOTE: as in the reference, a zero target-PSD bin yields inf/nan in the
    # ratio; the ml4gw 'fast' SpectralDensity path agrees with standard Welch
    # on all masked-in bins.

    ratio = psd_res / psd_tgt
    if asd:
        ratio = jnp.sqrt(ratio)
    psd_loss = jnp.mean(ratio)

    if alpha == 1:
        return psd_loss
    return alpha * psd_loss + (1.0 - alpha) * mse_loss


# ---------------------------------------------------------------------------
# Pure-numpy reference (mirrors the PyTorch module's math) for sanity checks.
# ---------------------------------------------------------------------------
def _reference_loss(pred, target, *, alpha, sample_rate, fftlength, overlap,
                    asd, freq_low, freq_high):
    pred = np.asarray(pred, np.float64)
    target = np.asarray(target, np.float64)
    B, T = pred.shape
    nperseg = int(fftlength * sample_rate)
    if overlap is None:
        overlap = fftlength / 2
    nstride = nperseg - int(overlap * sample_rate)
    nseg = (T - nperseg) // nstride + 1
    nfreq = nperseg // 2 + 1
    n = np.arange(nperseg)
    window = 0.5 - 0.5 * np.cos(2 * np.pi * n / nperseg)
    scale = 1.0 / (sample_rate * np.sum(window ** 2))

    def welch(x):
        psd = np.zeros((B, nfreq))
        for s in range(nseg):
            seg = x[:, s * nstride: s * nstride + nperseg]
            seg = seg - seg.mean(axis=-1, keepdims=True)
            spec = np.fft.rfft(seg * window, axis=-1)
            psd += np.abs(spec) ** 2
        psd = psd / nseg * scale
        psd[:, 1:] *= 2.0
        if nperseg % 2 == 0:
            psd[:, -1] /= 2.0
        return psd

    psd_res = welch(target - pred)
    psd_tgt = welch(target)
    dfreq = 1.0 / fftlength
    freqs = np.arange(0.0, sample_rate / 2 + dfreq, dfreq)
    mask = np.zeros_like(freqs, dtype=bool)
    for lo, hi in zip(np.atleast_1d(freq_low), np.atleast_1d(freq_high)):
        mask |= (lo <= freqs) & (freqs < hi)
    ratio = psd_res[:, mask[:nfreq]] / psd_tgt[:, mask[:nfreq]]
    if asd:
        ratio = np.sqrt(ratio)
    psd_loss = ratio.mean()
    mse = np.mean((pred - target) ** 2)
    return alpha * psd_loss + (1 - alpha) * mse


if __name__ == "__main__":
    k1, k2 = jax.random.split(jax.random.PRNGKey(0))

    # --- Test 1: lane-unaligned Welch sizes -> host-framed fallback path -------
    B, T = 2, 256
    sample_rate, fftlength = 32.0, 2.0          # nperseg=64, nstride=32, 7 segs
    target = jax.random.normal(k1, (B, T), dtype=jnp.float32)
    pred = target + 0.1 * jax.random.normal(k2, (B, T), dtype=jnp.float32)
    kwargs = dict(alpha=0.5, sample_rate=sample_rate, fftlength=fftlength,
                  overlap=None, asd=False, freq_low=4.0, freq_high=12.0)
    loss = jax.block_until_ready(composite_psd_loss(pred, target, **kwargs))
    ref = _reference_loss(np.asarray(pred), np.asarray(target), **kwargs)
    rel = abs(float(loss) - float(ref)) / (abs(float(ref)) + 1e-12)
    assert jnp.isfinite(loss) and rel < 0.1, (float(loss), float(ref), rel)

    # --- Test 2: 128-aligned sizes -> in-kernel framing + 2 frequency tiles ----
    B2, T2 = 2, 1024
    sr2, fft2, ovl2 = 128.0, 2.0, 1.0           # nperseg=256, nstride=128, 7 segs
    t2 = jax.random.normal(jax.random.PRNGKey(1), (B2, T2), dtype=jnp.float32)
    p2 = t2 + 0.1 * jax.random.normal(jax.random.PRNGKey(2), (B2, T2), dtype=jnp.float32)
    kwargs2 = dict(alpha=1.0, sample_rate=sr2, fftlength=fft2, overlap=ovl2,
                   asd=True, freq_low=5.0, freq_high=50.0)
    loss2 = jax.block_until_ready(
        composite_psd_loss(p2, t2, freq_tile=128, **kwargs2))
    ref2 = _reference_loss(np.asarray(p2), np.asarray(t2), **kwargs2)
    rel2 = abs(float(loss2) - float(ref2)) / (abs(float(ref2)) + 1e-12)
    assert jnp.isfinite(loss2) and rel2 < 0.1, (float(loss2), float(ref2), rel2)

    # accuracy mode: float32 operands on the MXU
    loss2_f32 = jax.block_until_ready(
        composite_psd_loss(p2, t2, freq_tile=128, matmul_dtype=jnp.float32, **kwargs2))
    rel2_f32 = abs(float(loss2_f32) - float(ref2)) / (abs(float(ref2)) + 1e-12)
    assert rel2_f32 < 0.05, (float(loss2_f32), float(ref2), rel2_f32)

    # --- Test 3: alpha == 0 -> plain MSE (no Pallas / Welch work at all) -------
    loss0 = jax.block_until_ready(composite_psd_loss(pred, target, alpha=0.0))
    mse_ref = float(np.mean((np.asarray(pred) - np.asarray(target)) ** 2))
    assert abs(float(loss0) - mse_ref) / (mse_ref + 1e-12) < 1e-4

    print("KERNEL_OK")
</pallas_src>

<mosaic_0001>
module attributes {stable_mosaic.version = 11 : i64} {
  func.func @_probe_copy_kernel(%arg0: i32, %arg1: memref<8x128xf32, #tpu.memory_space<vmem>>, %arg2: memref<8x128xf32, #tpu.memory_space<vmem>>) attributes {dimension_semantics = [#tpu.dimension_semantics<arbitrary>], iteration_bounds = array<i64: 2>, scalar_prefetch = 0 : i64, scratch_operands = 0 : i64, tpu.core_type = #tpu.core_type<tc>, window_params = [{pipeline_mode = #tpu.pipeline_mode<synchronous>, transform_indices = @transform_0, window_bounds = array<i64: 8, 128>}, {pipeline_mode = #tpu.pipeline_mode<synchronous>, transform_indices = @transform_1, window_bounds = array<i64: 8, 128>}]} {
    %c0 = arith.constant 0 : index
    %c0_0 = arith.constant 0 : index
    %0 = vector.load %arg1[%c0, %c0_0] : memref<8x128xf32, #tpu.memory_space<vmem>>, vector<8x128xf32>
    %c0_1 = arith.constant 0 : index
    %c0_2 = arith.constant 0 : index
    %1 = vector.load %arg2[%c0_1, %c0_2] : memref<8x128xf32, #tpu.memory_space<vmem>>, vector<8x128xf32>
    tpu.vector_store %arg2[%c0_1, %c0_2], %0 {strides = array<i32>} : memref<8x128xf32, #tpu.memory_space<vmem>>, vector<8x128xf32>,
    return
  }
  func.func @transform_0(%arg0: i32) -> (i32, i32) {
    %c0_i32 = arith.constant 0 : i32
    %c0_i32_0 = arith.constant 0 : i32
    %c0_i32_1 = arith.constant 0 : i32
    return %c0_i32, %c0_i32_0 : i32, i32
  }
  func.func @transform_1(%arg0: i32) -> (i32, i32) {
    %c0_i32 = arith.constant 0 : i32
    %c0_i32_0 = arith.constant 0 : i32
    %c0_i32_1 = arith.constant 0 : i32
    return %c0_i32, %c0_i32_0 : i32, i32
  }
}

module attributes {stable_mosaic.version = 11 : i64} {
  func.func @kernel(%arg0: i32, %arg1: i32, %arg2: memref<112x64xbf16, #tpu.memory_space<vmem>>, %arg3: memref<64x256xbf16, #tpu.memory_space<vmem>>, %arg4: memref<16x128xf32, #tpu.memory_space<vmem>>) attributes {dimension_semantics = [#tpu.dimension_semantics<parallel>, #tpu.dimension_semantics<parallel>], iteration_bounds = array<i64: 1, 1>, scalar_prefetch = 0 : i64, scratch_operands = 0 : i64, tpu.core_type = #tpu.core_type<tc>, window_params = [{transform_indices = @transform_0, window_bounds = array<i64: 112, 64>}, {transform_indices = @transform_1, window_bounds = array<i64: 64, 256>}, {transform_indices = @transform_2, window_bounds = array<i64: 16, 128>}]} {
    %c0 = arith.constant 0 : index
    %c0_0 = arith.constant 0 : index
    %0 = vector.load %arg2[%c0, %c0_0] : memref<112x64xbf16, #tpu.memory_space<vmem>>, vector<112x64xbf16>
    %c0_1 = arith.constant 0 : index
    %c0_2 = arith.constant 0 : index
    %1 = vector.load %arg3[%c0_1, %c0_2] : memref<64x256xbf16, #tpu.memory_space<vmem>>, vector<64x256xbf16>
    %cst = arith.constant dense<0.000000e+00> : vector<112x256xf32>
    %2 = tpu.matmul %0, %1, %cst {dimension_numbers = #tpu.dot_dimension_numbers<[1], [0], [0], [1], [0, 0, 1, 1], [], []>} : vector<112x64xbf16>, vector<64x256xbf16>, vector<112x256xf32> -> vector<112x256xf32>
    %3 = arith.mulf %2, %2 : vector<112x256xf32>
    %4 = vector.extract_strided_slice %3 {offsets = [0, 0], sizes = [112, 128], strides = [1, 1]} : vector<112x256xf32> to vector<112x128xf32>
    %5 = vector.extract_strided_slice %3 {offsets = [0, 128], sizes = [112, 128], strides = [1, 1]} : vector<112x256xf32> to vector<112x128xf32>
    %6 = arith.addf %4, %5 : vector<112x128xf32>
    %7 = vector.extract_strided_slice %6 {offsets = [0, 0], sizes = [16, 128], strides = [1, 1]} : vector<112x128xf32> to vector<16x128xf32>
    %8 = vector.extract_strided_slice %6 {offsets = [16, 0], sizes = [16, 128], strides = [1, 1]} : vector<112x128xf32> to vector<16x128xf32>
    %9 = arith.addf %7, %8 : vector<16x128xf32>
    %10 = vector.extract_strided_slice %6 {offsets = [32, 0], sizes = [16, 128], strides = [1, 1]} : vector<112x128xf32> to vector<16x128xf32>
    %11 = arith.addf %9, %10 : vector<16x128xf32>
    %12 = vector.extract_strided_slice %6 {offsets = [48, 0], sizes = [16, 128], strides = [1, 1]} : vector<112x128xf32> to vector<16x128xf32>
    %13 = arith.addf %11, %12 : vector<16x128xf32>
    %14 = vector.extract_strided_slice %6 {offsets = [64, 0], sizes = [16, 128], strides = [1, 1]} : vector<112x128xf32> to vector<16x128xf32>
    %15 = arith.addf %13, %14 : vector<16x128xf32>
    %16 = vector.extract_strided_slice %6 {offsets = [80, 0], sizes = [16, 128], strides = [1, 1]} : vector<112x128xf32> to vector<16x128xf32>
    %17 = arith.addf %15, %16 : vector<16x128xf32>
    %18 = vector.extract_strided_slice %6 {offsets = [96, 0], sizes = [16, 128], strides = [1, 1]} : vector<112x128xf32> to vector<16x128xf32>
    %19 = arith.addf %17, %18 : vector<16x128xf32>
    %c0_3 = arith.constant 0 : index
    %c0_4 = arith.constant 0 : index
    %20 = vector.load %arg4[%c0_3, %c0_4] : memref<16x128xf32, #tpu.memory_space<vmem>>, vector<16x128xf32>
    tpu.vector_store %arg4[%c0_3, %c0_4], %19 {strides = array<i32>} : memref<16x128xf32, #tpu.memory_space<vmem>>, vector<16x128xf32>,
    return
  }
  func.func @transform_0(%arg0: i32, %arg1: i32) -> (i32, i32) {
    %c0_i32 = arith.constant 0 : i32
    %c0_i32_0 = arith.constant 0 : i32
    return %arg0, %c0_i32 : i32, i32
  }
  func.func @transform_1(%arg0: i32, %arg1: i32) -> (i32, i32) {
    %c0_i32 = arith.constant 0 : i32
    %c0_i32_0 = arith.constant 0 : i32
    return %c0_i32, %arg1 : i32, i32
  }
  func.func @transform_2(%arg0: i32, %arg1: i32) -> (i32, i32) {
    %c0_i32 = arith.constant 0 : i32
    return %arg0, %arg1 : i32, i32
  }
}

</mosaic_0001>

<llo_original>
// kernel: tpu_custom_call.1
$region0: #{tpu_custom_call.1}
  #allocation0 [shape = 'u32[]', space=smem, size = 0x4, offset = 0x4, fixed_abs, tag = 'smem constant byte address 0x4 - core index']
  #allocation1 [shape = 'u32[144,128]{1,0:T(1,128)}', space=vmem, size = 0x12000, scoped, tag = 'internal scratch']
  %s0 = inlined_call_operand.hbm [shape: f32[8,128], index: 0, kind: input, shape index: {}]
  %s1 = inlined_call_operand.hbm [shape: f32[8,128], index: 1, kind: output, shape index: {}]
  %s2 = sld [smem:[#allocation0]]
  $region41: #{tpu_custom_call.1} parent=0
    _
  %s4 = ssub.s32 1, %s2
  %s5 = scalar_select 0, %s4, %s2
  $region1: #{tpu_custom_call.1} parent=0
    #allocation2 [shape = 'u8[4096]{0}', space=vmem, size = 0x1000, scoped, tag = 'input window, operand 0, single buffered']
    #allocation3 [shape = 's32[2]{0}', space=sflag, size = 0x8, scoped, tag = 'scoped memory for tpu_custom_call.1']
    #allocation4 [shape = 's32[2]{0}', space=sflag, size = 0x8, scoped, tag = 'scoped memory for tpu_custom_call.1']
    #allocation5 [shape = 'u8[4096]{0}', space=vmem, size = 0x1000, scoped, tag = 'output window, operand 0, single buffered']
    %6 = vsyncpa [#allocation3], 0
    %7 = vsyncpa [#allocation4], 0
    loop: start=0, step=1, limit=4
    $region2: #{tpu_custom_call.1} parent=1 // loop_pre_header
      _
    $region3: #{tpu_custom_call.1} parent=1 // loop_header
      %s9 = sphi 0, %s13
      %p10 = scmp.ge.s32.totalorder %s9, 4
      %s17 = sphi 0, %s17
      %s19 = sphi 0, %s17
      %s20 = sphi 0, %s19
      %s34 = sphi 0, %s20
      %s38 = sphi 0, %s38
      %s40 = sphi 0, %s38
      %s41 = sphi 0, %s40
      %s55 = sphi 0, %s41
    $region4: #{tpu_custom_call.1} parent=1 // loop_header_branch
      %12 = sbr.rel (%p10) target = $region8
    $region5: #{tpu_custom_call.1} parent=1 // loop_body
      %s14 = ssub.s32 %s9, 1
      %s15 = ssub.s32 %s9, 2
      %s16 = sadd.s32 %s9, 1
      %s18 = sadd.s32 %s17, 1
      %p21 = scmp.eq.s32.totalorder %s9, 1
      %p22 = scmp.ne.s32.totalorder %s17, %s19
      %p23 = scmp.eq.s32.totalorder %s9, 0
      %p24 = por %p22, %p23
      %p25 = scmp.ne.s32.totalorder %s17, %s19
      %p26 = scmp.eq.s32.totalorder %s14, 1
      %p27 = por %p25, %p26
      %p28 = scmp.ne.s32.totalorder %s19, %s20
      %p29 = scmp.eq.s32.totalorder %s14, 0
      %p30 = por %p28, %p29
      %p31 = scmp.ne.s32.totalorder %s19, %s20
      %p32 = scmp.eq.s32.totalorder %s15, 1
      %p33 = por %p31, %p32
      %p35 = scmp.ne.s32.totalorder %s20, %s34
      %p36 = scmp.eq.s32.totalorder %s15, 0
      %p37 = por %p35, %p36
      %s39 = sadd.s32 %s38, 1
      %p42 = scmp.eq.s32.totalorder %s9, 1
      %p43 = scmp.ne.s32.totalorder %s38, %s40
      %p44 = scmp.eq.s32.totalorder %s9, 0
      %p45 = por %p43, %p44
      %p46 = scmp.ne.s32.totalorder %s38, %s40
      %p47 = scmp.eq.s32.totalorder %s14, 1
      %p48 = por %p46, %p47
      %p49 = scmp.ne.s32.totalorder %s40, %s41
      %p50 = scmp.eq.s32.totalorder %s14, 0
      %p51 = por %p49, %p50
      %p52 = scmp.ne.s32.totalorder %s40, %s41
      %p53 = scmp.eq.s32.totalorder %s15, 1
      %p54 = por %p52, %p53
      %p56 = scmp.ne.s32.totalorder %s41, %s55
      %p57 = scmp.eq.s32.totalorder %s15, 0
      %p58 = por %p56, %p57
      %p59 = scmp.le.s32.totalorder 1, %s9
      %p60 = scmp.lt.s32.totalorder %s9, 3
      %p61 = pnand %p59, %p60
      %p62 = pneg %p61
      // Predicated region
      $region9: #{tpu_custom_call.1} parent=5 // pred_check
        _
      $region10: #{tpu_custom_call.1} parent=5 // pred_check_branch
        %64 = sbr.rel (%p61) target = $region12
      $region11: #{tpu_custom_call.1} parent=5 // pred_region
        %s65 = ssub.s32 %s9, 1
        // Predicated region
        $region13: #{tpu_custom_call.1} parent=11 // pred_check
          %p66 = pneg %p30
        $region14: #{tpu_custom_call.1} parent=11 // pred_check_branch
          %68 = sbr.rel (%p66) target = $region16
        $region15: #{tpu_custom_call.1} parent=11 // pred_region
          %s70 = ssub.s32 128, 128
          %71 = vsyncadd [#allocation3], %s70
          %s73 = sshll.u32 [#allocation2], 4
          %s74 = int_to_ptr.vmem [resolvable:$true] %s73
          %76 = dma.hbm_to_vmem [thread:$0]  %s0, 128, %s74, [#allocation3]
        $region16: #{tpu_custom_call.1} parent=11 // pred_fallthru
          _
      $region12: #{tpu_custom_call.1} parent=5 // pred_fallthru
        _
      %p77 = scmp.lt.s32.totalorder %s9, 2
      // Predicated region
      $region17: #{tpu_custom_call.1} parent=5 // pred_check
        %p78 = pneg %p77
      $region18: #{tpu_custom_call.1} parent=5 // pred_check_branch
        %80 = sbr.rel (%p78) target = $region20
      $region19: #{tpu_custom_call.1} parent=5 // pred_region
        _
      $region20: #{tpu_custom_call.1} parent=5 // pred_fallthru
        _
      %p81 = scmp.le.s32.totalorder 1, %s9
      %p82 = scmp.lt.s32.totalorder %s9, 3
      %p83 = pnand %p81, %p82
      %p84 = pneg %p83
      // Predicated region
      $region21: #{tpu_custom_call.1} parent=5 // pred_check
        _
      $region22: #{tpu_custom_call.1} parent=5 // pred_check_branch
        %86 = sbr.rel (%p83) target = $region24
      $region23: #{tpu_custom_call.1} parent=5 // pred_region
        %s87 = ssub.s32 %s9, 1
        // Predicated region
        $region25: #{tpu_custom_call.1} parent=23 // pred_check
          %p88 = pneg %p30
        $region26: #{tpu_custom_call.1} parent=23 // pred_check_branch
          %90 = sbr.rel (%p88) target = $region28
        $region27: #{tpu_custom_call.1} parent=23 // pred_region
          %91 = dma.done [#allocation3], 128
        $region28: #{tpu_custom_call.1} parent=23 // pred_fallthru
          _
        %p92 = pneg %p30
        %p93 = pneg %p27
        %p94 = pneg %p51
        %p95 = pneg %p48
        %v96 = vld [vmem:[#allocation2] sm:$0xff]
        %97 = vst [vmem:[#allocation5] sm:$0xff] %v96
        // Predicated region
        $region29: #{tpu_custom_call.1} parent=23 // pred_check
          %p98 = pneg %p48
        $region30: #{tpu_custom_call.1} parent=23 // pred_check_branch
          %100 = sbr.rel (%p98) target = $region32
        $region31: #{tpu_custom_call.1} parent=23 // pred_region
          %s102 = ssub.s32 128, 128
          %103 = vsyncadd [#allocation4], %s102
          %s105 = sshll.u32 [#allocation5], 4
          %s106 = int_to_ptr.vmem [resolvable:$true] %s105
          %108 = dma.vmem_to_hbm [thread:$0]  %s106, 128, %s1, [#allocation4]
        $region32: #{tpu_custom_call.1} parent=23 // pred_fallthru
          _
        // Predicated region
        $region33: #{tpu_custom_call.1} parent=23 // pred_check
          %p109 = pneg %p48
        $region34: #{tpu_custom_call.1} parent=23 // pred_check_branch
          %111 = sbr.rel (%p109) target = $region36
        $region35: #{tpu_custom_call.1} parent=23 // pred_region
          %112 = dma.done [#allocation4], 128
        $region36: #{tpu_custom_call.1} parent=23 // pred_fallthru
          _
      $region24: #{tpu_custom_call.1} parent=5 // pred_fallthru
        _
      %p113 = scmp.le.s32.totalorder 2, %s9
      // Predicated region
      $region37: #{tpu_custom_call.1} parent=5 // pred_check
        %p114 = pneg %p113
      $region38: #{tpu_custom_call.1} parent=5 // pred_check_branch
        %116 = sbr.rel (%p114) target = $region40
      $region39: #{tpu_custom_call.1} parent=5 // pred_region
        %s117 = ssub.s32 %s9, 2
      $region40: #{tpu_custom_call.1} parent=5 // pred_fallthru
        _
    $region6: #{tpu_custom_call.1} parent=1 // loop_footer
      %s13 = sadd.s32 1, %s9
    $region7: #{tpu_custom_call.1} parent=1 // loop_footer_branch
      %8 = sbr.rel target = $region3
    $region8: #{tpu_custom_call.1} parent=1 // loop_exit
      _
    %118 = vsyncpa [#allocation3], 1
    %s119 = scalar_lea.sflag [#allocation3], 1
    %120 = vsyncpa %s119, 1
    %121 = vsyncpa [#allocation4], 1
    %s122 = scalar_lea.sflag [#allocation4], 1
    %123 = vsyncpa %s122, 1

// kernel: tpu_custom_call.1
$region0: #{tpu_custom_call.1}
  #allocation0 [shape = 'u32[]', space=smem, size = 0x4, offset = 0x4, fixed_abs, tag = 'smem constant byte address 0x4 - core index']
  #allocation1 [shape = 'u32[144,128]{1,0:T(1,128)}', space=vmem, size = 0x12000, scoped, tag = 'internal scratch']
  %s0 = inlined_call_operand.vmem [shape: bf16[112,64], index: 0, kind: input, shape index: {}]
  %s1 = inlined_call_operand.vmem [shape: bf16[64,256], index: 1, kind: input, shape index: {}]
  %s2 = inlined_call_operand.hbm [shape: f32[16,128], index: 2, kind: output, shape index: {}]
  %s3 = sld [smem:[#allocation0]]
  $region18: #{tpu_custom_call.1} parent=0
    _
  %s5 = ssub.s32 1, %s3
  %s6 = scalar_select 0, %s5, %s3
  $region1: #{tpu_custom_call.1} parent=0
    #allocation2 [shape = 'u8[8192]{0}', space=vmem, size = 0x2000, scoped, tag = 'output window, operand 0, single buffered']
    #allocation3 [shape = 's32[1]{0}', space=sflag, size = 0x4, scoped, tag = 'scoped memory for tpu_custom_call.1']
    %7 = vsyncpa [#allocation3], 0
    // Predicated region
    $region2: #{tpu_custom_call.1} parent=1 // pred_check
      _
    $region3: #{tpu_custom_call.1} parent=1 // pred_check_branch
      %9 = sbr.rel (0) target = $region5
    $region4: #{tpu_custom_call.1} parent=1 // pred_region
      _
    $region5: #{tpu_custom_call.1} parent=1 // pred_fallthru
      _
    // Predicated region
    $region6: #{tpu_custom_call.1} parent=1 // pred_check
      _
    $region7: #{tpu_custom_call.1} parent=1 // pred_check_branch
      %11 = sbr.rel (0) target = $region9
    $region8: #{tpu_custom_call.1} parent=1 // pred_region
      _
    $region9: #{tpu_custom_call.1} parent=1 // pred_fallthru
      _
    %v13 = vld [vmem:[%s0] sm:$0xf]
    %v14 = vld [vmem:[%s0 + $0x4] sm:$0xf]
    %v15 = vld [vmem:[%s0 + $0x8] sm:$0xf]
    %v16 = vld [vmem:[%s0 + $0xc] sm:$0xf]
    %v17 = vld [vmem:[%s0 + $0x10] sm:$0xf]
    %v18 = vld [vmem:[%s0 + $0x14] sm:$0xf]
    %v19 = vld [vmem:[%s0 + $0x18] sm:$0xf]
    %v20 = vld [vmem:[%s0 + $0x1c] sm:$0xf]
    %v21 = vld [vmem:[%s0 + $0x20] sm:$0xf]
    %v22 = vld [vmem:[%s0 + $0x24] sm:$0xf]
    %v23 = vld [vmem:[%s0 + $0x28] sm:$0xf]
    %v24 = vld [vmem:[%s0 + $0x2c] sm:$0xf]
    %v25 = vld [vmem:[%s0 + $0x30] sm:$0xf]
    %v26 = vld [vmem:[%s0 + $0x34] sm:$0xf]
    %v27 = vld [vmem:[%s1] sm:$0xff]
    %v28 = vld [vmem:[%s1 + $0x8] sm:$0xff]
    %v29 = vld [vmem:[%s1 + $0x10] sm:$0xff]
    %v30 = vld [vmem:[%s1 + $0x18] sm:$0xff]
    %v31 = vld [vmem:[%s1 + $0x20] sm:$0xff]
    %v32 = vld [vmem:[%s1 + $0x28] sm:$0xff]
    %v33 = vld [vmem:[%s1 + $0x30] sm:$0xff]
    %v34 = vld [vmem:[%s1 + $0x38] sm:$0xff]
    %v49 = vunpack.c.l.b16 %v13
    %v50 = vunpack.c.l.b16 %v14
    %v51 = vunpack.c.l.b16 %v15
    %v52 = vunpack.c.l.b16 %v16
    %v53 = vunpack.c.l.b16 %v17
    %v54 = vunpack.c.l.b16 %v18
    %v55 = vunpack.c.l.b16 %v19
    %v56 = vunpack.c.l.b16 %v20
    %v57 = vunpack.c.l.b16 %v21
    %v58 = vunpack.c.l.b16 %v22
    %v59 = vunpack.c.l.b16 %v23
    %v60 = vunpack.c.l.b16 %v24
    %v61 = vunpack.c.l.b16 %v25
    %v62 = vunpack.c.l.b16 %v26
    %v63 = vpack.c.b16 %v50, %v49
    %v64 = vpack.c.b16 %v52, %v51
    %v65 = vpack.c.b16 %v54, %v53
    %v66 = vpack.c.b16 %v56, %v55
    %v67 = vpack.c.b16 %v58, %v57
    %v68 = vpack.c.b16 %v60, %v59
    %v69 = vpack.c.b16 %v62, %v61
    %v78 = vunpack.c.l.b16 %v27
    %v79 = vunpack.c.h.b16 %v27
    %v80 = vunpack.c.l.b16 %v28
    %v81 = vunpack.c.h.b16 %v28
    %v82 = vunpack.c.l.b16 %v29
    %v83 = vunpack.c.h.b16 %v29
    %v84 = vunpack.c.l.b16 %v30
    %v85 = vunpack.c.h.b16 %v30
    %v86 = vunpack.c.l.b16 %v31
    %v87 = vunpack.c.h.b16 %v31
    %v88 = vunpack.c.l.b16 %v32
    %v89 = vunpack.c.h.b16 %v32
    %v90 = vunpack.c.l.b16 %v33
    %v91 = vunpack.c.h.b16 %v33
    %v92 = vunpack.c.l.b16 %v34
    %v93 = vunpack.c.h.b16 %v34
    %v94 = vpack.c.b16 %v80, %v78
    %v95 = vpack.c.b16 %v81, %v79
    %v96 = vpack.c.b16 %v84, %v82
    %v97 = vpack.c.b16 %v85, %v83
    %v98 = vpack.c.b16 %v88, %v86
    %v99 = vpack.c.b16 %v89, %v87
    %v100 = vpack.c.b16 %v92, %v90
    %v101 = vpack.c.b16 %v93, %v91
    %vm110 = vcmask 523264
    %v112 = vsel %vm110, %v63, 0
    %v115 = vsel %vm110, %v64, 0
    %v118 = vsel %vm110, %v65, 0
    %v121 = vsel %vm110, %v66, 0
    %v124 = vsel %vm110, %v67, 0
    %v127 = vsel %vm110, %v68, 0
    %v130 = vsel %vm110, %v69, 0
    %132 = vmatprep.subr.bf16.mxu0 %v95
    %133 = vmatpush1.bf16.msra.mxu0 %v94
    %134 = vmatprep.subr.bf16.mxu0 %v97
    %135 = vmatpush1.bf16.msra.mxu0 %v96
    %136 = vmatprep.subr.bf16.mxu0 %v99
    %137 = vmatpush1.bf16.msra.mxu0 %v98
    %138 = vmatprep.subr.bf16.mxu0 %v101
    %139 = vmatpush1.bf16.msra.mxu0 %v100
    %140 = vmatprep.subr.bf16.mxu0 0
    %141 = vmatpush1.bf16.msra.mxu0 0
    %142 = vmatprep.subr.bf16.mxu0 0
    %143 = vmatpush1.bf16.msra.mxu0 0
    %144 = vmatprep.subr.bf16.mxu0 0
    %145 = vmatpush1.bf16.msra.mxu0 0
    %146 = vmatprep.subr.bf16.mxu0 0
    %147 = vmatpush1.bf16.msra.mxu0 0
    %148 = vmatprep.subr.bf16.mxu0 0
    %149 = vmatpush1.bf16.msra.mxu0 0
    %150 = vmatprep.subr.bf16.mxu0 0
    %151 = vmatpush1.bf16.msra.mxu0 0
    %152 = vmatprep.subr.bf16.mxu0 0
    %153 = vmatpush1.bf16.msra.mxu0 0
    %154 = vmatprep.subr.bf16.mxu0 0
    %155 = vmatpush1.bf16.msra.mxu0 0
    %156 = vmatprep.subr.bf16.mxu0 0
    %157 = vmatpush1.bf16.msra.mxu0 0
    %158 = vmatprep.subr.bf16.mxu0 0
    %159 = vmatpush1.bf16.msra.mxu0 0
    %160 = vmatprep.subr.bf16.mxu0 0
    %161 = vmatpush1.bf16.msra.mxu0 0
    %162 = vmatprep.subr.bf16.mxu0 0
    %163 = vmatpush1.bf16.msra.mxu0 0
    %164 = vmatprep.mubr.bf16.mxu0 0
    %165 = vmatmul.mubr.bf16.gmra.mrb[0].mxu0 %v112
    %v166 = vpop.f32.mrb[0].mxu0
    %v167 = vadd.f32 0.0, %v166
    %v168 = vpop.f32.mrb[0].mxu0
    %v169 = vadd.f32 0.0, %v168
    %v170 = vpop.f32.mrb[0].mxu0
    %v171 = vadd.f32 0.0, %v170
    %v172 = vpop.f32.mrb[0].mxu0
    %v173 = vadd.f32 0.0, %v172
    %174 = vmatprep.mubr.bf16.mxu0 0
    %175 = vmatmul.mubr.bf16.gmra.mrb[0].mxu0 %v115
    %v176 = vpop.f32.mrb[0].mxu0
    %v177 = vadd.f32 0.0, %v176
    %v178 = vpop.f32.mrb[0].mxu0
    %v179 = vadd.f32 0.0, %v178
    %v180 = vpop.f32.mrb[0].mxu0
    %v181 = vadd.f32 0.0, %v180
    %v182 = vpop.f32.mrb[0].mxu0
    %v183 = vadd.f32 0.0, %v182
    %184 = vmatprep.mubr.bf16.mxu0 0
    %185 = vmatmul.mubr.bf16.gmra.mrb[0].mxu0 %v118
    %v186 = vpop.f32.mrb[0].mxu0
    %v187 = vadd.f32 0.0, %v186
    %v188 = vpop.f32.mrb[0].mxu0
    %v189 = vadd.f32 0.0, %v188
    %v190 = vpop.f32.mrb[0].mxu0
    %v191 = vadd.f32 0.0, %v190
    %v192 = vpop.f32.mrb[0].mxu0
    %v193 = vadd.f32 0.0, %v192
    %194 = vmatprep.mubr.bf16.mxu0 0
    %195 = vmatmul.mubr.bf16.gmra.mrb[0].mxu0 %v121
    %v196 = vpop.f32.mrb[0].mxu0
    %v197 = vadd.f32 0.0, %v196
    %v198 = vpop.f32.mrb[0].mxu0
    %v199 = vadd.f32 0.0, %v198
    %v200 = vpop.f32.mrb[0].mxu0
    %v201 = vadd.f32 0.0, %v200
    %v202 = vpop.f32.mrb[0].mxu0
    %v203 = vadd.f32 0.0, %v202
    %204 = vmatprep.mubr.bf16.mxu0 0
    %205 = vmatmul.mubr.bf16.gmra.mrb[0].mxu0 %v124
    %v206 = vpop.f32.mrb[0].mxu0
    %v207 = vadd.f32 0.0, %v206
    %v208 = vpop.f32.mrb[0].mxu0
    %v209 = vadd.f32 0.0, %v208
    %v210 = vpop.f32.mrb[0].mxu0
    %v211 = vadd.f32 0.0, %v210
    %v212 = vpop.f32.mrb[0].mxu0
    %v213 = vadd.f32 0.0, %v212
    %214 = vmatprep.mubr.bf16.mxu0 0
    %215 = vmatmul.mubr.bf16.gmra.mrb[0].mxu0 %v127
    %v216 = vpop.f32.mrb[0].mxu0
    %v217 = vadd.f32 0.0, %v216
    %v218 = vpop.f32.mrb[0].mxu0
    %v219 = vadd.f32 0.0, %v218
    %v220 = vpop.f32.mrb[0].mxu0
    %v221 = vadd.f32 0.0, %v220
    %v222 = vpop.f32.mrb[0].mxu0
    %v223 = vadd.f32 0.0, %v222
    %224 = vmatprep.mubr.bf16.mxu0 0
    %225 = vmatmul.mubr.bf16.gmra.mrb[0].mxu0 %v130
    %v226 = vpop.f32.mrb[0].mxu0
    %v227 = vadd.f32 0.0, %v226
    %v228 = vpop.f32.mrb[0].mxu0
    %v229 = vadd.f32 0.0, %v228
    %v230 = vpop.f32.mrb[0].mxu0
    %v231 = vadd.f32 0.0, %v230
    %v232 = vpop.f32.mrb[0].mxu0
    %v233 = vadd.f32 0.0, %v232
    %234 = vdwg.mxu0
    %v235 = vmul.f32 %v167, %v167
    %v236 = vmul.f32 %v169, %v169
    %v237 = vmul.f32 %v171, %v171
    %v238 = vmul.f32 %v173, %v173
    %v239 = vmul.f32 %v177, %v177
    %v240 = vmul.f32 %v179, %v179
    %v241 = vmul.f32 %v181, %v181
    %v242 = vmul.f32 %v183, %v183
    %v243 = vmul.f32 %v187, %v187
    %v244 = vmul.f32 %v189, %v189
    %v245 = vmul.f32 %v191, %v191
    %v246 = vmul.f32 %v193, %v193
    %v247 = vmul.f32 %v197, %v197
    %v248 = vmul.f32 %v199, %v199
    %v249 = vmul.f32 %v201, %v201
    %v250 = vmul.f32 %v203, %v203
    %v251 = vmul.f32 %v207, %v207
    %v252 = vmul.f32 %v209, %v209
    %v253 = vmul.f32 %v211, %v211
    %v254 = vmul.f32 %v213, %v213
    %v255 = vmul.f32 %v217, %v217
    %v256 = vmul.f32 %v219, %v219
    %v257 = vmul.f32 %v221, %v221
    %v258 = vmul.f32 %v223, %v223
    %v259 = vmul.f32 %v227, %v227
    %v260 = vmul.f32 %v229, %v229
    %v261 = vmul.f32 %v231, %v231
    %v262 = vmul.f32 %v233, %v233
    %v263 = vadd.f32 %v235, %v236
    %v264 = vadd.f32 %v237, %v238
    %v265 = vadd.f32 %v239, %v240
    %v266 = vadd.f32 %v241, %v242
    %v267 = vadd.f32 %v243, %v244
    %v268 = vadd.f32 %v245, %v246
    %v269 = vadd.f32 %v247, %v248
    %v270 = vadd.f32 %v249, %v250
    %v271 = vadd.f32 %v251, %v252
    %v272 = vadd.f32 %v253, %v254
    %v273 = vadd.f32 %v255, %v256
    %v274 = vadd.f32 %v257, %v258
    %v275 = vadd.f32 %v259, %v260
    %v276 = vadd.f32 %v261, %v262
    %v277 = vadd.f32 %v263, %v265
    %v278 = vadd.f32 %v264, %v266
    %v279 = vadd.f32 %v277, %v267
    %v280 = vadd.f32 %v278, %v268
    %v281 = vadd.f32 %v279, %v269
    %v282 = vadd.f32 %v280, %v270
    %v283 = vadd.f32 %v281, %v271
    %v284 = vadd.f32 %v282, %v272
    %v285 = vadd.f32 %v283, %v273
    %v286 = vadd.f32 %v284, %v274
    %v287 = vadd.f32 %v285, %v275
    %v288 = vadd.f32 %v286, %v276
    %289 = vst [vmem:[#allocation2] sm:$0xff] %v287
    %290 = vst [vmem:[#allocation2 + $0x8] sm:$0xff] %v288
    // Predicated region
    $region10: #{tpu_custom_call.1} parent=1 // pred_check
      _
    $region11: #{tpu_custom_call.1} parent=1 // pred_check_branch
      %292 = sbr.rel (0) target = $region13
    $region12: #{tpu_custom_call.1} parent=1 // pred_region
      %s294 = ssub.s32 256, 256
      %295 = vsyncadd [#allocation3], %s294
      %s296 = sshll.u32 [#allocation2], 4
      %s297 = int_to_ptr.vmem [resolvable:$true] %s296
      %302 = dma.vmem_to_hbm [thread:$0]  %s297, 256, %s2, [#allocation3], 128, 128, 8
    $region13: #{tpu_custom_call.1} parent=1 // pred_fallthru
      _
    // Predicated region
    $region14: #{tpu_custom_call.1} parent=1 // pred_check
      _
    $region15: #{tpu_custom_call.1} parent=1 // pred_check_branch
      %304 = sbr.rel (0) target = $region17
    $region16: #{tpu_custom_call.1} parent=1 // pred_region
      %305 = dma.done [#allocation3], 256
    $region17: #{tpu_custom_call.1} parent=1 // pred_fallthru
      _
    %306 = vsyncpa [#allocation3], 1

</llo_original>
